<compile_context>
chip_gen: v5e
topology: v5e:2x2
jax: 0.10.0
libtpu: 0.0.40
codegen_flags: <defaults>
</compile_context>

<pallas_src>
import functools
import numpy as np
import jax
import jax.numpy as jnp
from jax.experimental import pallas as pl
from jax.experimental.pallas import tpu as pltpu

EPS = 1e-6


def _round_up(x, m):
    return (x + m - 1) // m * m


# ---------------------------------------------------------------------------
# Kernel: LayerNorm over the last (feature) axis for a (block_rows, F) tile.
# Matches torch semantics exactly: unbiased std, division by (std + eps).
# ---------------------------------------------------------------------------
def _layernorm_kernel(x_ref, a_ref, b_ref, o_ref, *, eps, inv_nm1):
    # Upcast inside the kernel: f32 accumulation keeps large-F reductions
    # accurate and v5e's VPU has no bf16 ALU anyway.
    x = x_ref[...].astype(jnp.float32)                       # (BR, F)
    a = a_ref[...].astype(jnp.float32)                       # (1, F)
    b = b_ref[...].astype(jnp.float32)                       # (1, F)

    mean = jnp.mean(x, axis=-1, keepdims=True)               # (BR, 1)
    xc = x - mean
    # Two-pass (stable) unbiased variance, * 1/(N-1) precomputed on host.
    var = jnp.sum(xc * xc, axis=-1, keepdims=True) * inv_nm1
    inv = 1.0 / (jnp.sqrt(var) + eps)                        # exact, tolerance-safe
    o_ref[...] = (a * (xc * inv) + b).astype(o_ref.dtype)


def layer_norm(x, a_2, b_2, eps=EPS, target_tile_bytes=4 << 20, min_grid_steps=8):
    """LayerNorm over the last axis of x; a_2 / b_2 have shape (features,)."""
    orig_shape = x.shape
    feat = orig_shape[-1]
    rows = int(np.prod(orig_shape[:-1])) if len(orig_shape) > 1 else 1

    # Native-dtype I/O; reshapes are metadata-only (no extra HBM passes).
    x2 = x.reshape(rows, feat)
    a2 = a_2.reshape(1, feat)
    b2 = b_2.reshape(1, feat)

    itemsize = jnp.dtype(x.dtype).itemsize
    pack = 32 // itemsize            # sublane packing: f32 -> 8, bf16 -> 16, int8 -> 32

    # Row-tile sizing: ~target_tile_bytes per input tile, but keep the grid with
    # at least `min_grid_steps` steps (v7x two-TC sharding, pipeline warm-up) and
    # never larger than the (packing-rounded) row count.
    br = max(pack, (target_tile_bytes // max(feat * itemsize, 1)) // pack * pack)
    br = min(br, max(pack, _round_up(pl.cdiv(rows, min_grid_steps), pack)))
    br = min(br, _round_up(rows, pack))
    grid = pl.cdiv(rows, br)         # partial last block is masked by Pallas

    # VMEM budget: double-buffered x + out tiles plus the (tiny) params, with
    # slack; cap leaves headroom for v7x's 64 MiB physical VMEM.
    p_itemsize = jnp.dtype(a_2.dtype).itemsize
    tile_bytes = br * feat * itemsize
    vmem_bytes = 2 * (2 * tile_bytes + 2 * feat * p_itemsize) + (2 << 20)
    vmem_bytes = int(min(max(vmem_bytes, 16 << 20), 48 << 20))

    # TODO(synk): feat == 1 gives std = 0/0 = NaN (same as torch.std); not guarded.
    inv_nm1 = 1.0 / (feat - 1) if feat > 1 else float("nan")
    kernel = functools.partial(_layernorm_kernel, eps=eps, inv_nm1=inv_nm1)

    out = pl.pallas_call(
        kernel,
        out_shape=jax.ShapeDtypeStruct((rows, feat), x.dtype),
        grid=(grid,),
        in_specs=[
            pl.BlockSpec((br, feat), lambda i: (i, 0)),      # x rows tile
            pl.BlockSpec((1, feat), lambda i: (0, 0)),       # a_2 (broadcast)
            pl.BlockSpec((1, feat), lambda i: (0, 0)),       # b_2 (broadcast)
        ],
        out_specs=pl.BlockSpec((br, feat), lambda i: (i, 0)),
        compiler_params=pltpu.CompilerParams(
            dimension_semantics=("parallel",),
            vmem_limit_bytes=vmem_bytes),
    )(x2, a2, b2)

    return out.reshape(orig_shape)


# Pure-JAX reference (same math as the PyTorch module) for correctness checks.
def layer_norm_ref(x, a_2, b_2, eps=EPS):
    mean = jnp.mean(x, axis=-1, keepdims=True)
    std = jnp.std(x, axis=-1, keepdims=True, ddof=1)         # unbiased, like torch.std
    return a_2 * (x - mean) / (std + eps) + b_2


if __name__ == "__main__":
    key = jax.random.PRNGKey(0)
    kx, ka, kb, kx2 = jax.random.split(key, 4)

    # Small shapes consistent with the module: (batch, seq, features)
    B, S, F = 2, 8, 512
    # module inits a_2=ones, b_2=zeros; use non-trivial values to exercise the affine path
    a_2 = 1.0 + 0.1 * jax.random.normal(ka, (F,), jnp.float32)
    b_2 = 0.1 * jax.random.normal(kb, (F,), jnp.float32)

    ln = jax.jit(layer_norm)

    # f32 path (native-dtype pass-through, multi-step parallel grid).
    x = jax.random.normal(kx, (B, S, F), jnp.float32)
    out = ln(x, a_2, b_2)
    jax.block_until_ready(out)
    assert out.shape == x.shape and out.dtype == x.dtype
    assert bool(jnp.all(jnp.isfinite(out)))
    np.testing.assert_allclose(np.asarray(out), np.asarray(layer_norm_ref(x, a_2, b_2)),
                               rtol=1e-5, atol=1e-5)

    # Ragged rows (rows % block_rows != 0) -> exercises the masked boundary block
    # path that replaced the jnp.pad / out[:rows] slice.
    xr = jax.random.normal(kx2, (3, 5, F), jnp.float32)
    outr = ln(xr, a_2, b_2)
    jax.block_until_ready(outr)
    np.testing.assert_allclose(np.asarray(outr),
                               np.asarray(layer_norm_ref(xr, a_2, b_2)),
                               rtol=1e-5, atol=1e-5)

    # bf16 I/O path: halves HBM traffic; math still done in f32 inside the kernel.
    xb = x.astype(jnp.bfloat16)
    outb = ln(xb, a_2, b_2)
    jax.block_until_ready(outb)
    assert outb.dtype == jnp.bfloat16
    refb = layer_norm_ref(xb.astype(jnp.float32), a_2, b_2)
    np.testing.assert_allclose(np.asarray(outb.astype(jnp.float32)), np.asarray(refb),
                               rtol=5e-2, atol=5e-2)

    print("KERNEL_OK")
</pallas_src>

<mosaic_0001>
module attributes {stable_mosaic.version = 11 : i64} {
  func.func @_layernorm_kernel(%arg0: i32, %arg1: memref<8x512xf32, #tpu.memory_space<vmem>>, %arg2: memref<1x512xf32, #tpu.memory_space<vmem>>, %arg3: memref<1x512xf32, #tpu.memory_space<vmem>>, %arg4: memref<8x512xf32, #tpu.memory_space<vmem>>) attributes {dimension_semantics = [#tpu.dimension_semantics<parallel>], iteration_bounds = array<i64: 2>, scalar_prefetch = 0 : i64, scratch_operands = 0 : i64, tpu.core_type = #tpu.core_type<tc>, window_params = [{transform_indices = @transform_0, window_bounds = array<i64: 8, 512>}, {pipeline_mode = #tpu.pipeline_mode<synchronous>, transform_indices = @transform_1, window_bounds = array<i64: 1, 512>}, {pipeline_mode = #tpu.pipeline_mode<synchronous>, transform_indices = @transform_2, window_bounds = array<i64: 1, 512>}, {transform_indices = @transform_3, window_bounds = array<i64: 8, 512>}]} {
    %c0 = arith.constant 0 : index
    %c0_0 = arith.constant 0 : index
    %0 = vector.load %arg1[%c0, %c0_0] : memref<8x512xf32, #tpu.memory_space<vmem>>, vector<8x512xf32>
    %c0_1 = arith.constant 0 : index
    %c0_2 = arith.constant 0 : index
    %1 = vector.load %arg2[%c0_1, %c0_2] : memref<1x512xf32, #tpu.memory_space<vmem>>, vector<1x512xf32>
    %c0_3 = arith.constant 0 : index
    %c0_4 = arith.constant 0 : index
    %2 = vector.load %arg3[%c0_3, %c0_4] : memref<1x512xf32, #tpu.memory_space<vmem>>, vector<1x512xf32>
    %cst = arith.constant dense<0.000000e+00> : vector<8xf32>
    %3 = vector.multi_reduction <add>, %0, %cst [1] : vector<8x512xf32> to vector<8xf32>
    %4 = vector.shape_cast %3 : vector<8xf32> to vector<8x1xf32>
    %cst_5 = arith.constant 5.120000e+02 : f32
    %5 = vector.broadcast %cst_5 : f32 to vector<8x1xf32>
    %6 = arith.divf %4, %5 : vector<8x1xf32>
    %7 = vector.broadcast %6 : vector<8x1xf32> to vector<8x512xf32>
    %8 = arith.subf %0, %7 : vector<8x512xf32>
    %9 = arith.mulf %8, %8 : vector<8x512xf32>
    %cst_6 = arith.constant dense<0.000000e+00> : vector<8xf32>
    %10 = vector.multi_reduction <add>, %9, %cst_6 [1] : vector<8x512xf32> to vector<8xf32>
    %11 = vector.shape_cast %10 : vector<8xf32> to vector<8x1xf32>
    %cst_7 = arith.constant 0.00195694715 : f32
    %12 = vector.broadcast %cst_7 : f32 to vector<8x1xf32>
    %13 = arith.mulf %11, %12 : vector<8x1xf32>
    %14 = math.sqrt %13 : vector<8x1xf32>
    %cst_8 = arith.constant 9.99999997E-7 : f32
    %15 = vector.broadcast %cst_8 : f32 to vector<8x1xf32>
    %16 = arith.addf %14, %15 : vector<8x1xf32>
    %cst_9 = arith.constant 1.000000e+00 : f32
    %17 = vector.broadcast %cst_9 : f32 to vector<8x1xf32>
    %18 = arith.divf %17, %16 : vector<8x1xf32>
    %19 = vector.broadcast %18 : vector<8x1xf32> to vector<8x512xf32>
    %20 = arith.mulf %8, %19 : vector<8x512xf32>
    %21 = vector.broadcast %1 : vector<1x512xf32> to vector<8x512xf32>
    %22 = arith.mulf %21, %20 : vector<8x512xf32>
    %23 = vector.broadcast %2 : vector<1x512xf32> to vector<8x512xf32>
    %24 = arith.addf %22, %23 : vector<8x512xf32>
    %c0_10 = arith.constant 0 : index
    %c0_11 = arith.constant 0 : index
    %25 = vector.load %arg4[%c0_10, %c0_11] : memref<8x512xf32, #tpu.memory_space<vmem>>, vector<8x512xf32>
    tpu.vector_store %arg4[%c0_10, %c0_11], %24 {strides = array<i32>} : memref<8x512xf32, #tpu.memory_space<vmem>>, vector<8x512xf32>,
    return
  }
  func.func @transform_0(%arg0: i32) -> (i32, i32) {
    %c0_i32 = arith.constant 0 : i32
    %c0_i32_0 = arith.constant 0 : i32
    return %arg0, %c0_i32 : i32, i32
  }
  func.func @transform_1(%arg0: i32) -> (i32, i32) {
    %c0_i32 = arith.constant 0 : i32
    %c0_i32_0 = arith.constant 0 : i32
    %c0_i32_1 = arith.constant 0 : i32
    return %c0_i32, %c0_i32_0 : i32, i32
  }
  func.func @transform_2(%arg0: i32) -> (i32, i32) {
    %c0_i32 = arith.constant 0 : i32
    %c0_i32_0 = arith.constant 0 : i32
    %c0_i32_1 = arith.constant 0 : i32
    return %c0_i32, %c0_i32_0 : i32, i32
  }
  func.func @transform_3(%arg0: i32) -> (i32, i32) {
    %c0_i32 = arith.constant 0 : i32
    %c0_i32_0 = arith.constant 0 : i32
    return %arg0, %c0_i32 : i32, i32
  }
}

</mosaic_0001>

<llo_original>
// kernel: layer_norm.1
$region0: #{layer_norm.1}
  #allocation0 [shape = 'u32[]', space=smem, size = 0x4, offset = 0x4, fixed_abs, tag = 'smem constant byte address 0x4 - core index']
  #allocation1 [shape = 'u32[72,128]{1,0:T(1,128)}', space=vmem, size = 0x9000, scoped, tag = 'internal scratch']
  %s0 = inlined_call_operand.hbm [shape: f32[16,512], index: 0, kind: input, shape index: {}]
  %s1 = inlined_call_operand.hbm [shape: f32[1,512], index: 1, kind: input, shape index: {}]
  %s2 = inlined_call_operand.vmem [shape: f32[1,512], index: 2, kind: input, shape index: {}]
  %s3 = inlined_call_operand.hbm [shape: f32[16,512], index: 3, kind: output, shape index: {}]
  %s4 = sld [smem:[#allocation0]]
  $region53: #{layer_norm.1} parent=0
    _
  %s6 = ssub.s32 1, %s4
  %s7 = scalar_select 0, %s6, %s4
  $region1: #{layer_norm.1} parent=0
    #allocation2 [shape = 'u8[32768]{0}', space=vmem, size = 0x8000, scoped, tag = 'input window, operand 0']
    #allocation3 [shape = 's32[2]{0}', space=sflag, size = 0x8, scoped, tag = 'scoped memory for layer_norm.1']
    #allocation4 [shape = 's32[2]{0}', space=sflag, size = 0x8, scoped, tag = 'scoped memory for layer_norm.1']
    #allocation5 [shape = 'u8[2048]{0}', space=vmem, size = 0x800, scoped, tag = 'input window, operand 1, single buffered']
    #allocation6 [shape = 's32[1]{0}', space=sflag, size = 0x4, scoped, tag = 'scoped memory for layer_norm.1']
    #allocation7 [shape = 'u8[32768]{0}', space=vmem, size = 0x8000, scoped, tag = 'output window, operand 0']
    %8 = vsyncpa [#allocation3], 0
    %s9 = scalar_lea.sflag [#allocation3], 1
    %10 = vsyncpa %s9, 0
    %11 = vsyncpa [#allocation6], 0
    %12 = vsyncpa [#allocation4], 0
    %s13 = scalar_lea.sflag [#allocation4], 1
    %14 = vsyncpa %s13, 0
    loop: start=0, step=1, limit=4
    $region2: #{layer_norm.1} parent=1 // loop_pre_header
      _
    $region3: #{layer_norm.1} parent=1 // loop_header
      %s16 = sphi 0, %s20
      %p17 = scmp.ge.s32.totalorder %s16, 4
      %s26 = sphi 0, %s28
      %s29 = sphi 0, %s26
      %s30 = sphi 0, %s29
      %s46 = sphi 0, %s30
      %s50 = sphi 0, %s50
      %s52 = sphi 0, %s50
      %s53 = sphi 0, %s52
      %s67 = sphi 0, %s53
      %s71 = sphi 0, %s71
      %s73 = sphi 0, %s71
      %s74 = sphi 0, %s73
      %s88 = sphi 0, %s74
      %s94 = sphi 0, %s96
      %s97 = sphi 0, %s94
      %s98 = sphi 0, %s97
      %s114 = sphi 0, %s98
    $region4: #{layer_norm.1} parent=1 // loop_header_branch
      %19 = sbr.rel (%p17) target = $region8
    $region5: #{layer_norm.1} parent=1 // loop_body
      %s21 = ssub.s32 %s16, 1
      %s22 = ssub.s32 %s16, 2
      %s23 = sadd.s32 %s16, 1
      %s24 = ssub.s32 %s16, %s23
      %p25 = scmp.eq.s32.totalorder %s24, 0
      %s27 = sadd.s32 %s26, 1
      %s28 = scalar_select %p25, %s26, %s27
      %p31 = pneg %p25
      %p32 = scmp.eq.s32.totalorder %s16, 1
      %p33 = por %p31, %p32
      %p34 = scmp.ne.s32.totalorder %s26, %s29
      %p35 = scmp.eq.s32.totalorder %s16, 0
      %p36 = por %p34, %p35
      %p37 = scmp.ne.s32.totalorder %s26, %s29
      %p38 = scmp.eq.s32.totalorder %s21, 1
      %p39 = por %p37, %p38
      %p40 = scmp.ne.s32.totalorder %s29, %s30
      %p41 = scmp.eq.s32.totalorder %s21, 0
      %p42 = por %p40, %p41
      %p43 = scmp.ne.s32.totalorder %s29, %s30
      %p44 = scmp.eq.s32.totalorder %s22, 1
      %p45 = por %p43, %p44
      %p47 = scmp.ne.s32.totalorder %s30, %s46
      %p48 = scmp.eq.s32.totalorder %s22, 0
      %p49 = por %p47, %p48
      %s51 = sadd.s32 %s50, 1
      %p54 = scmp.eq.s32.totalorder %s16, 1
      %p55 = scmp.ne.s32.totalorder %s50, %s52
      %p56 = scmp.eq.s32.totalorder %s16, 0
      %p57 = por %p55, %p56
      %p58 = scmp.ne.s32.totalorder %s50, %s52
      %p59 = scmp.eq.s32.totalorder %s21, 1
      %p60 = por %p58, %p59
      %p61 = scmp.ne.s32.totalorder %s52, %s53
      %p62 = scmp.eq.s32.totalorder %s21, 0
      %p63 = por %p61, %p62
      %p64 = scmp.ne.s32.totalorder %s52, %s53
      %p65 = scmp.eq.s32.totalorder %s22, 1
      %p66 = por %p64, %p65
      %p68 = scmp.ne.s32.totalorder %s53, %s67
      %p69 = scmp.eq.s32.totalorder %s22, 0
      %p70 = por %p68, %p69
      %s72 = sadd.s32 %s71, 1
      %p75 = scmp.eq.s32.totalorder %s16, 1
      %p76 = scmp.ne.s32.totalorder %s71, %s73
      %p77 = scmp.eq.s32.totalorder %s16, 0
      %p78 = por %p76, %p77
      %p79 = scmp.ne.s32.totalorder %s71, %s73
      %p80 = scmp.eq.s32.totalorder %s21, 1
      %p81 = por %p79, %p80
      %p82 = scmp.ne.s32.totalorder %s73, %s74
      %p83 = scmp.eq.s32.totalorder %s21, 0
      %p84 = por %p82, %p83
      %p85 = scmp.ne.s32.totalorder %s73, %s74
      %p86 = scmp.eq.s32.totalorder %s22, 1
      %p87 = por %p85, %p86
      %p89 = scmp.ne.s32.totalorder %s74, %s88
      %p90 = scmp.eq.s32.totalorder %s22, 0
      %p91 = por %p89, %p90
      %s92 = ssub.s32 %s16, %s23
      %p93 = scmp.eq.s32.totalorder %s92, 0
      %s95 = sadd.s32 %s94, 1
      %s96 = scalar_select %p93, %s94, %s95
      %p99 = pneg %p93
      %p100 = scmp.eq.s32.totalorder %s16, 1
      %p101 = por %p99, %p100
      %p102 = scmp.ne.s32.totalorder %s94, %s97
      %p103 = scmp.eq.s32.totalorder %s16, 0
      %p104 = por %p102, %p103
      %p105 = scmp.ne.s32.totalorder %s94, %s97
      %p106 = scmp.eq.s32.totalorder %s21, 1
      %p107 = por %p105, %p106
      %p108 = scmp.ne.s32.totalorder %s97, %s98
      %p109 = scmp.eq.s32.totalorder %s21, 0
      %p110 = por %p108, %p109
      %p111 = scmp.ne.s32.totalorder %s97, %s98
      %p112 = scmp.eq.s32.totalorder %s22, 1
      %p113 = por %p111, %p112
      %p115 = scmp.ne.s32.totalorder %s98, %s114
      %p116 = scmp.eq.s32.totalorder %s22, 0
      %p117 = por %p115, %p116
      %p118 = scmp.le.s32.totalorder 1, %s16
      %p119 = scmp.lt.s32.totalorder %s16, 3
      %p120 = pnand %p118, %p119
      %p121 = pneg %p120
      // Predicated region
      $region9: #{layer_norm.1} parent=5 // pred_check
        _
      $region10: #{layer_norm.1} parent=5 // pred_check_branch
        %123 = sbr.rel (%p120) target = $region12
      $region11: #{layer_norm.1} parent=5 // pred_region
        %s124 = ssub.s32 %s16, 1
        // Predicated region
        $region13: #{layer_norm.1} parent=11 // pred_check
          %p125 = pneg %p63
        $region14: #{layer_norm.1} parent=11 // pred_check_branch
          %127 = sbr.rel (%p125) target = $region16
        $region15: #{layer_norm.1} parent=11 // pred_region
          %129 = vsyncadd [#allocation6], 0
          %s131 = sshll.u32 %s1, 4
          %s132 = int_to_ptr.hbm [resolvable:$true] %s131
          %s133 = sshll.u32 [#allocation5], 4
          %s134 = int_to_ptr.vmem [resolvable:$true] %s133
          %136 = dma.hbm_to_vmem [thread:$0]  %s132, 64, %s134, [#allocation6]
        $region16: #{layer_norm.1} parent=11 // pred_fallthru
          _
        // Predicated region
        $region17: #{layer_norm.1} parent=11 // pred_check
          %p137 = pneg %p84
        $region18: #{layer_norm.1} parent=11 // pred_check_branch
          %139 = sbr.rel (%p137) target = $region20
        $region19: #{layer_norm.1} parent=11 // pred_region
          _
        $region20: #{layer_norm.1} parent=11 // pred_fallthru
          _
      $region12: #{layer_norm.1} parent=5 // pred_fallthru
        _
      %p140 = scmp.lt.s32.totalorder %s16, 2
      // Predicated region
      $region21: #{layer_norm.1} parent=5 // pred_check
        %p141 = pneg %p140
      $region22: #{layer_norm.1} parent=5 // pred_check_branch
        %143 = sbr.rel (%p141) target = $region24
      $region23: #{layer_norm.1} parent=5 // pred_region
        // Predicated region
        $region25: #{layer_norm.1} parent=23 // pred_check
          %p144 = pneg %p36
        $region26: #{layer_norm.1} parent=23 // pred_check_branch
          %146 = sbr.rel (%p144) target = $region28
        $region27: #{layer_norm.1} parent=23 // pred_region
          %s147 = sand.u32 %s26, 1
          %s148 = scalar_lea.sflag [#allocation3], %s147
          %s149 = sand.u32 %s26, 1
          %s150 = smul.addr %s149, 32
          %s151 = scalar_lea.vmem [#allocation2], %s150
          %153 = vsyncadd %s148, 0
          %s154 = smul.addr %s16, 4
          %s155 = smul.addr %s154, 8
          %s156 = scalar_lea.hbm %s0, %s155
          %s158 = sshll.u32 %s156, 4
          %s159 = int_to_ptr.hbm [resolvable:$true] %s158
          %s160 = sshll.u32 %s151, 4
          %s161 = int_to_ptr.vmem [resolvable:$true] %s160
          %163 = dma.hbm_to_vmem [thread:$0]  %s159, 512, %s161, %s148
        $region28: #{layer_norm.1} parent=23 // pred_fallthru
          _
      $region24: #{layer_norm.1} parent=5 // pred_fallthru
        _
      %p164 = scmp.le.s32.totalorder 1, %s16
      %p165 = scmp.lt.s32.totalorder %s16, 3
      %p166 = pnand %p164, %p165
      %p167 = pneg %p166
      // Predicated region
      $region29: #{layer_norm.1} parent=5 // pred_check
        _
      $region30: #{layer_norm.1} parent=5 // pred_check_branch
        %169 = sbr.rel (%p166) target = $region32
      $region31: #{layer_norm.1} parent=5 // pred_region
        %s170 = ssub.s32 %s16, 1
        %s171 = sand.u32 %s29, 1
        %s172 = scalar_lea.sflag [#allocation3], %s171
        %s173 = sand.u32 %s29, 1
        %s174 = smul.addr %s173, 32
        %s175 = scalar_lea.vmem [#allocation2], %s174
        // Predicated region
        $region33: #{layer_norm.1} parent=31 // pred_check
          %p176 = pneg %p42
        $region34: #{layer_norm.1} parent=31 // pred_check_branch
          %178 = sbr.rel (%p176) target = $region36
        $region35: #{layer_norm.1} parent=31 // pred_region
          %180 = dma.done %s172, 512
        $region36: #{layer_norm.1} parent=31 // pred_fallthru
          _
        // Predicated region
        $region37: #{layer_norm.1} parent=31 // pred_check
          %p181 = pneg %p63
        $region38: #{layer_norm.1} parent=31 // pred_check_branch
          %183 = sbr.rel (%p181) target = $region40
        $region39: #{layer_norm.1} parent=31 // pred_region
          %185 = dma.done [#allocation6], 64
        $region40: #{layer_norm.1} parent=31 // pred_fallthru
          _
        %s186 = sand.u32 %s29, 1
        %s187 = scalar_lea.sflag [#allocation3], %s186
        %s188 = sand.u32 %s29, 1
        %s189 = smul.addr %s188, 32
        %s190 = scalar_lea.vmem [#allocation2], %s189
        %p191 = pneg %p42
        %p192 = pneg %p39
        %p193 = pneg %p63
        %p194 = pneg %p60
        %p195 = pneg %p84
        %p196 = pneg %p81
        %p197 = pneg %p110
        %p198 = pneg %p107
        %s199 = sand.u32 %s97, 1
        %s200 = scalar_lea.sflag [#allocation4], %s199
        %s201 = sand.u32 %s97, 1
        %s202 = smul.addr %s201, 32
        %s203 = scalar_lea.vmem [#allocation7], %s202
        %v204 = vld [vmem:[%s175] sm:$0xff]
        %v205 = vld [vmem:[%s175 + $0x8] sm:$0xff]
        %v206 = vld [vmem:[%s175 + $0x10] sm:$0xff]
        %v207 = vld [vmem:[%s175 + $0x18] sm:$0xff]
        %v208 = vld [vmem:[#allocation5] sm:$0xf]
        %v209 = vld [vmem:[%s2] sm:$0xf]
        %v210 = vadd.f32 %v204, %v205
        %v211 = vadd.f32 %v210, %v206
        %v212 = vadd.f32 %v211, %v207
        %213 = vadd.xlane.f32.xlu0 %v212
        %v214 = vpop.xlane.xlu0 %213
        %v215 = vrcp.pop 512.0
        %v216 = vmul.f32 512.0, %v215
        %v217 = vsub.f32 1.0, %v216
        %v218 = vmul.f32 %v215, %v217
        %v219 = vadd.f32 %v215, %v218
        %vm220 = vweird.f32 %v215
        %v221 = vsel %vm220, %v215, %v219
        %v222 = vmul.f32 %v214, %v221
        %v223 = vsub.f32 %v204, %v222
        %v224 = vsub.f32 %v205, %v222
        %v225 = vsub.f32 %v206, %v222
        %v226 = vsub.f32 %v207, %v222
        %v227 = vmul.f32 %v223, %v223
        %v228 = vmul.f32 %v224, %v224
        %v229 = vmul.f32 %v225, %v225
        %v230 = vmul.f32 %v226, %v226
        %v231 = vadd.f32 %v227, %v228
        %v232 = vadd.f32 %v231, %v229
        %v233 = vadd.f32 %v232, %v230
        %234 = vadd.xlane.f32.xlu0 %v233
        %v235 = vpop.xlane.xlu0 %234
        %v236 = vmul.f32 %v235, 0.0019569471
        %v237 = vrsqrt.pop %v236
        %v238 = vmul.f32 %v237, %v236
        %v239 = vmul.f32 %v238, %v237
        %v240 = vmul.f32 0.5, %v239
        %v241 = vsub.f32 1.5, %v240
        %v242 = vmul.f32 %v237, %v241
        %v243 = vmul.f32 %v236, %v242
        %vm244 = vcmp.eq.f32.partialorder %v236, inf
        %v245 = vsel %vm244, %v236, %v243
        %vm246 = vcmp.eq.f32.partialorder %v236, 0.0
        %v247 = vand.u32 %v236, 2147483648
        %v248 = vsel %vm246, %v247, %v245
        %v249 = vadd.f32 %v248, 1e-06
        %v250 = vrcp.pop %v249
        %v251 = vmul.f32 %v249, %v250
        %v252 = vsub.f32 1.0, %v251
        %v253 = vmul.f32 %v250, %v252
        %v254 = vadd.f32 %v250, %v253
        %vm255 = vweird.f32 %v249
        %vm256 = vweird.f32 %v250
        %vm257 = vmor %vm255, %vm256
        %v258 = vsel %vm257, %v250, %v254
        %v259 = vand.u32 2147483647, %v249
        %vm260 = vcmp.eq.f32.partialorder %v259, 8.507059e+37
        %v261 = vand.u32 %v249, 2147483648
        %v262 = vor.u32 1.1754944e-38, %v261
        %v263 = vsel %vm260, %v262, %v258
        %v264 = vmul.f32 1.0, %v263
        %v265 = vmul.f32 %v223, %v264
        %v266 = vmul.f32 %v224, %v264
        %v267 = vmul.f32 %v225, %v264
        %v268 = vmul.f32 %v226, %v264
        %v270 = vperm.slane %v208, 0
        %v271 = vperm.slane %v208, 1
        %v272 = vperm.slane %v208, 2
        %v273 = vperm.slane %v208, 3
        %v278 = vmul.f32 %v270, %v265
        %v279 = vmul.f32 %v271, %v266
        %v280 = vmul.f32 %v272, %v267
        %v281 = vmul.f32 %v273, %v268
        %v283 = vperm.slane %v209, 0
        %v284 = vperm.slane %v209, 1
        %v285 = vperm.slane %v209, 2
        %v286 = vperm.slane %v209, 3
        %v291 = vadd.f32 %v278, %v283
        %v292 = vadd.f32 %v279, %v284
        %v293 = vadd.f32 %v280, %v285
        %v294 = vadd.f32 %v281, %v286
        %295 = vst [vmem:[%s203] sm:$0xff] %v291
        %296 = vst [vmem:[%s203 + $0x8] sm:$0xff] %v292
        %297 = vst [vmem:[%s203 + $0x10] sm:$0xff] %v293
        %298 = vst [vmem:[%s203 + $0x18] sm:$0xff] %v294
        %s299 = sand.u32 %s97, 1
        %s300 = scalar_lea.sflag [#allocation4], %s299
        %s301 = sand.u32 %s97, 1
        %s302 = smul.addr %s301, 32
        %s303 = scalar_lea.vmem [#allocation7], %s302
        // Predicated region
        $region41: #{layer_norm.1} parent=31 // pred_check
          %p304 = pneg %p107
        $region42: #{layer_norm.1} parent=31 // pred_check_branch
          %306 = sbr.rel (%p304) target = $region44
        $region43: #{layer_norm.1} parent=31 // pred_region
          %308 = vsyncadd %s300, 0
          %s309 = smul.addr %s21, 4
          %s310 = smul.addr %s309, 8
          %s311 = scalar_lea.hbm %s3, %s310
          %s313 = sshll.u32 %s303, 4
          %s314 = int_to_ptr.vmem [resolvable:$true] %s313
          %s315 = sshll.u32 %s311, 4
          %s316 = int_to_ptr.hbm [resolvable:$true] %s315
          %318 = dma.vmem_to_hbm [thread:$0]  %s314, 512, %s316, %s300
        $region44: #{layer_norm.1} parent=31 // pred_fallthru
          _
      $region32: #{layer_norm.1} parent=5 // pred_fallthru
        _
      %p319 = scmp.le.s32.totalorder 2, %s16
      // Predicated region
      $region45: #{layer_norm.1} parent=5 // pred_check
        %p320 = pneg %p319
      $region46: #{layer_norm.1} parent=5 // pred_check_branch
        %322 = sbr.rel (%p320) target = $region48
      $region47: #{layer_norm.1} parent=5 // pred_region
        %s323 = ssub.s32 %s16, 2
        // Predicated region
        $region49: #{layer_norm.1} parent=47 // pred_check
          %p324 = pneg %p113
        $region50: #{layer_norm.1} parent=47 // pred_check_branch
          %326 = sbr.rel (%p324) target = $region52
        $region51: #{layer_norm.1} parent=47 // pred_region
          %s327 = sand.u32 %s98, 1
          %s328 = scalar_lea.sflag [#allocation4], %s327
          %s329 = sand.u32 %s98, 1
          %s330 = smul.addr %s329, 32
          %s331 = scalar_lea.vmem [#allocation7], %s330
          %333 = dma.done %s328, 512
        $region52: #{layer_norm.1} parent=47 // pred_fallthru
          _
      $region48: #{layer_norm.1} parent=5 // pred_fallthru
        _
    $region6: #{layer_norm.1} parent=1 // loop_footer
      %s20 = sadd.s32 1, %s16
    $region7: #{layer_norm.1} parent=1 // loop_footer_branch
      %15 = sbr.rel target = $region3
    $region8: #{layer_norm.1} parent=1 // loop_exit
      _
    %334 = vsyncpa [#allocation3], 1
    %s335 = scalar_lea.sflag [#allocation3], 1
    %336 = vsyncpa %s335, 1
    %337 = vsyncpa [#allocation6], 1
    %338 = vsyncpa [#allocation4], 1
    %s339 = scalar_lea.sflag [#allocation4], 1
    %340 = vsyncpa %s339, 1

</llo_original>
